<compile_context>
chip_gen: v7x
topology: tpu7x:2x2x1
jax: 0.10.0
libtpu: 0.0.40
codegen_flags: <defaults>
</compile_context>

<pallas_src>
import jax
import jax.numpy as jnp
from jax import lax
from jax.experimental import pallas as pl
from jax.experimental.pallas import tpu as pltpu


_LANE = 128
_TILE_BYTES_BUDGET = 8 * 1024 * 1024   # per (single) feature tile buffer
_MAX_TK = 32 * 1024                    # lane-aligned ceiling on the K tile


def _cdiv(a, b):
    return -(-a // b)


def _round_up(x, mult):
    return ((x + mult - 1) // mult) * mult


def _device_kind():
    try:
        return jax.devices()[0].device_kind.lower()
    except Exception:
        return ""


def _vmem_limit_bytes():
    # v7x: 64 MiB physical VMEM per TensorCore -> leave compiler headroom.
    # v5e / v6e: 128 MiB physical -> 64 MiB scoped limit is comfortable.
    if "v7" in _device_kind():
        return 48 * 1024 * 1024
    return 64 * 1024 * 1024


def _num_core_splits():
    # v7x has 2 TensorCores per chip; split the K reduction across them via a
    # leading "parallel" grid axis.  v5e / v6e have a single TC.
    return 2 if "v7" in _device_kind() else 1


def _plan(m, k, itemsize):
    """Choose (tk, splits, k_steps_per_split, padded_K)."""
    vmem_limit = _vmem_limit_bytes()
    k_pad = _round_up(max(k, _LANE), _LANE)

    # HBM-streaming byte budget (amortize the per-grid-step fixed cost).
    tk = _TILE_BYTES_BUDGET // max(1, m * itemsize)
    # Keep the per-step (M, M) accumulator read-modify-write small relative
    # to the streamed feature bytes.
    tk = max(tk, 4 * m)
    tk = min(tk, _MAX_TK)
    # Hard VMEM cap: double-buffered feature tile + resident (M, M) f32
    # output/accumulator must fit under the scoped limit (with slack).
    resident_mm = 3 * m * m * 4
    vmem_for_tiles = max(vmem_limit - resident_mm - (4 << 20),
                         2 * m * _LANE * itemsize)
    tk = min(tk, vmem_for_tiles // (2 * m * itemsize))
    tk = max(_LANE, (tk // _LANE) * _LANE)

    if k_pad <= tk:
        tk = k_pad

    k_steps_total = _cdiv(k_pad, tk)
    splits = _num_core_splits()
    if k_steps_total < splits:
        splits = 1
    k_steps = _cdiv(k_steps_total, splits)
    k_padded = splits * k_steps * tk
    return tk, splits, k_steps, k_padded


# ---------------------------------------------------------------------------
# Kernel
# ---------------------------------------------------------------------------
def _gram_partial_kernel(feat_ref, out_ref):
    # feat_ref: (M, tk) feature tile (native dtype)
    # out_ref:  (M, M) f32 partial gram for this K split; resident across the
    #           "arbitrary" K axis -> used directly as the accumulator.
    kk = pl.program_id(1)

    @pl.when(kk == 0)
    def _():
        out_ref[...] = jnp.zeros_like(out_ref)

    x = feat_ref[...]
    # NT contraction (contract the last dim of both operands): X @ X^T on the
    # MXU with f32 accumulation; no materialized transpose of the tile.
    out_ref[...] += lax.dot_general(
        x, x,
        dimension_numbers=(((1,), (1,)), ((), ())),
        preferred_element_type=jnp.float32,
    )


# ---------------------------------------------------------------------------
# Wrappers
# ---------------------------------------------------------------------------
def gram_matrix(t):
    """Pallas equivalent of StyleLoss.gram_matrix (NCHW input)."""
    a, b, c, d = t.shape
    m, k = a * b, c * d
    feats = t.reshape(m, k)
    itemsize = feats.dtype.itemsize
    tk, splits, k_steps, k_padded = _plan(m, k, itemsize)
    if k_padded != k:
        feats = jnp.pad(feats, ((0, 0), (0, k_padded - k)))

    cost = pl.CostEstimate(
        flops=2 * m * m * k_padded,
        transcendentals=0,
        bytes_accessed=m * k_padded * itemsize + splits * m * m * 4,
    )

    partials = pl.pallas_call(
        _gram_partial_kernel,
        out_shape=jax.ShapeDtypeStruct((splits, m, m), jnp.float32),
        grid=(splits, k_steps),
        in_specs=[
            pl.BlockSpec((m, tk), lambda s, kk: (0, s * k_steps + kk)),
        ],
        out_specs=pl.BlockSpec((None, m, m), lambda s, kk: (s, 0, 0)),
        compiler_params=pltpu.CompilerParams(
            dimension_semantics=("parallel", "arbitrary"),
            vmem_limit_bytes=_vmem_limit_bytes(),
        ),
        cost_estimate=cost,
    )(feats)

    inv_norm = 1.0 / float(a * b * c * d)
    # Per-core partials are summed (and normalized) in one fused XLA pass.
    return jnp.sum(partials, axis=0) * inv_norm


def style_loss_forward(t, target_gram):
    """Pallas equivalent of StyleLoss.forward.

    Returns (t, loss, G):
      - t is passed through unchanged (as in the PyTorch module),
      - loss is MSE(gram(t), target_gram) (stored as self.loss in PyTorch),
      - G is the gram matrix of t.
    """
    G = gram_matrix(t)
    # Per perf review: the O(M^2) elementwise MSE is done by XLA for free,
    # keeping the kernel a pure HBM-streaming gram reduction.
    diff = G - target_gram.astype(jnp.float32)
    loss = jnp.mean(diff * diff)
    return t, loss, G


class StyleLoss:
    """JAX/Pallas port of the PyTorch StyleLoss module."""

    def __init__(self, target_feature):
        # target gram is "detached" == stop_gradient in JAX terms
        self.target = jax.lax.stop_gradient(gram_matrix(target_feature))
        self.loss = None

    def __call__(self, t):
        t_out, loss, _ = style_loss_forward(t, self.target)
        self.loss = loss
        return t_out


# ---------------------------------------------------------------------------
# Reference (pure JAX) for a quick sanity check
# ---------------------------------------------------------------------------
def _gram_ref(t):
    a, b, c, d = t.shape
    f = t.reshape(a * b, c * d).astype(jnp.float32)
    g = jnp.matmul(f, f.T, precision=lax.Precision.HIGHEST)
    return g / float(a * b * c * d)


if __name__ == "__main__":
    key = jax.random.PRNGKey(0)
    k1, k2, k3, k4, k5, k6 = jax.random.split(key, 6)

    # --- Case 1: small f32 NCHW maps (single K step): batch=2, ch=4, 16x16 ---
    tf1 = jax.random.normal(k1, (2, 4, 16, 16), dtype=jnp.float32)
    x1 = jax.random.normal(k2, (2, 4, 16, 16), dtype=jnp.float32)

    mod1 = StyleLoss(tf1)
    out1 = mod1(x1)
    jax.block_until_ready(out1)
    jax.block_until_ready(mod1.loss)

    G1 = gram_matrix(x1)
    G1_ref, T1_ref = _gram_ref(x1), _gram_ref(tf1)
    loss1_ref = jnp.mean((G1_ref - T1_ref) ** 2)
    assert out1.shape == x1.shape and jnp.array_equal(out1, x1)
    assert jnp.allclose(mod1.target, T1_ref, rtol=1e-4, atol=1e-5)
    assert jnp.allclose(G1, G1_ref, rtol=1e-4, atol=1e-5)
    assert jnp.allclose(mod1.loss, loss1_ref, rtol=1e-3, atol=1e-7)

    # --- Case 2: large K = 65536 > max tile -> multi-step K reduction
    #     (and, on v7x, a 2-way parallel split across TensorCores). ---
    tf2 = jax.random.normal(k3, (1, 8, 256, 256), dtype=jnp.float32)
    x2 = jax.random.normal(k4, (1, 8, 256, 256), dtype=jnp.float32)

    mod2 = StyleLoss(tf2)
    out2 = mod2(x2)
    jax.block_until_ready(out2)
    jax.block_until_ready(mod2.loss)

    G2_ref, T2_ref = _gram_ref(x2), _gram_ref(tf2)
    loss2_ref = jnp.mean((G2_ref - T2_ref) ** 2)
    assert jnp.array_equal(out2, x2)
    assert jnp.allclose(mod2.target, T2_ref, rtol=1e-4, atol=1e-5)
    assert jnp.allclose(mod2.loss, loss2_ref, rtol=1e-3, atol=1e-7)

    # --- Case 3: bf16 activations streamed in native dtype, f32 accumulate ---
    tf3 = jax.random.normal(k5, (1, 16, 64, 64), dtype=jnp.bfloat16)
    x3 = jax.random.normal(k6, (1, 16, 64, 64), dtype=jnp.bfloat16)

    mod3 = StyleLoss(tf3)
    out3 = mod3(x3)
    jax.block_until_ready(out3)
    jax.block_until_ready(mod3.loss)

    G3_ref, T3_ref = _gram_ref(x3), _gram_ref(tf3)
    loss3_ref = jnp.mean((G3_ref - T3_ref) ** 2)
    assert jnp.array_equal(out3, x3)
    assert jnp.allclose(mod3.target, T3_ref, rtol=1e-3, atol=1e-4)
    assert jnp.allclose(mod3.loss, loss3_ref, rtol=1e-2, atol=1e-6)

    print("KERNEL_OK")
</pallas_src>

<mosaic_0001>
module attributes {stable_mosaic.version = 11 : i64} {
  func.func @_gram_partial_kernel(%arg0: i32, %arg1: i32, %arg2: memref<8x256xf32, #tpu.memory_space<vmem>>, %arg3: memref<1x8x8xf32, #tpu.memory_space<vmem>>) attributes {dimension_semantics = [#tpu.dimension_semantics<parallel>, #tpu.dimension_semantics<arbitrary>], iteration_bounds = array<i64: 1, 1>, scalar_prefetch = 0 : i64, scratch_operands = 0 : i64, tpu.core_type = #tpu.core_type<tc>, window_params = [{transform_indices = @transform_0, window_bounds = array<i64: 8, 256>}, {transform_indices = @transform_1, window_bounds = array<i64: 1, 8, 8>}]} {
    %c0_i32 = arith.constant 0 : i32
    %0 = arith.cmpi eq, %arg1, %c0_i32 : i32
    %1 = arith.extui %0 : i1 to i32
    %c0_i32_0 = arith.constant 0 : i32
    %2 = arith.cmpi ne, %1, %c0_i32_0 : i32
    scf.if %2 {
      %cst_8 = arith.constant 0.000000e+00 : f32
      %11 = vector.broadcast %cst_8 : f32 to vector<8x8xf32>
      %c0_9 = arith.constant 0 : index
      %c0_10 = arith.constant 0 : index
      %c0_11 = arith.constant 0 : index
      %12 = vector.load %arg3[%c0_9, %c0_10, %c0_11] : memref<1x8x8xf32, #tpu.memory_space<vmem>>, vector<1x8x8xf32>
      %13 = vector.shape_cast %12 : vector<1x8x8xf32> to vector<8x8xf32>
      %14 = vector.shape_cast %11 : vector<8x8xf32> to vector<1x8x8xf32>
      tpu.vector_store %arg3[%c0_9, %c0_10, %c0_11], %14 {strides = array<i32>} : memref<1x8x8xf32, #tpu.memory_space<vmem>>, vector<1x8x8xf32>,
    } else {
    }
    %c0 = arith.constant 0 : index
    %c0_1 = arith.constant 0 : index
    %3 = vector.load %arg2[%c0, %c0_1] : memref<8x256xf32, #tpu.memory_space<vmem>>, vector<8x256xf32>
    %c0_2 = arith.constant 0 : index
    %c0_3 = arith.constant 0 : index
    %c0_4 = arith.constant 0 : index
    %4 = vector.load %arg3[%c0_2, %c0_3, %c0_4] : memref<1x8x8xf32, #tpu.memory_space<vmem>>, vector<1x8x8xf32>
    %5 = vector.shape_cast %4 : vector<1x8x8xf32> to vector<8x8xf32>
    %cst = arith.constant dense<0.000000e+00> : vector<8x8xf32>
    %6 = tpu.matmul %3, %3, %cst {dimension_numbers = #tpu.dot_dimension_numbers<[1], [1], [0], [0], [0, 0, 1, 0], [], []>} : vector<8x256xf32>, vector<8x256xf32>, vector<8x8xf32> -> vector<8x8xf32>
    %7 = arith.addf %5, %6 : vector<8x8xf32>
    %c0_5 = arith.constant 0 : index
    %c0_6 = arith.constant 0 : index
    %c0_7 = arith.constant 0 : index
    %8 = vector.load %arg3[%c0_5, %c0_6, %c0_7] : memref<1x8x8xf32, #tpu.memory_space<vmem>>, vector<1x8x8xf32>
    %9 = vector.shape_cast %8 : vector<1x8x8xf32> to vector<8x8xf32>
    %10 = vector.shape_cast %7 : vector<8x8xf32> to vector<1x8x8xf32>
    tpu.vector_store %arg3[%c0_5, %c0_6, %c0_7], %10 {strides = array<i32>} : memref<1x8x8xf32, #tpu.memory_space<vmem>>, vector<1x8x8xf32>,
    return
  }
  func.func @transform_0(%arg0: i32, %arg1: i32) -> (i32, i32) {
    %c1_i32 = arith.constant 1 : i32
    %0 = arith.muli %arg0, %c1_i32 : i32
    %1 = arith.addi %0, %arg1 : i32
    %c0_i32 = arith.constant 0 : i32
    %c0_i32_0 = arith.constant 0 : i32
    return %c0_i32, %1 : i32, i32
  }
  func.func @transform_1(%arg0: i32, %arg1: i32) -> (i32, i32, i32) {
    %c0_i32 = arith.constant 0 : i32
    %c0_i32_0 = arith.constant 0 : i32
    %c0_i32_1 = arith.constant 0 : i32
    return %arg0, %c0_i32, %c0_i32_0 : i32, i32, i32
  }
}

</mosaic_0001>

<llo_original>
// kernel: tpu_custom_call.1
$region0: #{tpu_custom_call.1}
  #allocation0 [shape = 'u32[]', space=smem, size = 0x4, offset = 0x4, fixed_abs, tag = 'smem constant byte address 0x4 - core index']
  #allocation1 [shape = 'u32[144,128]{1,0:T(1,128)}', space=vmem, size = 0x12000, scoped, tag = 'internal scratch']
  %s0 = inlined_call_operand.hbm [shape: f32[8,256], index: 0, kind: input, shape index: {}]
  %s1 = inlined_call_operand.hbm [shape: f32[1,8,8], index: 1, kind: output, shape index: {}]
  %s2 = sld [smem:[#allocation0]]
  $region22: #{tpu_custom_call.1} parent=0
    _
  %s4 = ssub.s32 1, %s2
  %s5 = scalar_select 0, %s4, %s2
  $region1: #{tpu_custom_call.1} parent=0
    #allocation2 [shape = 'u8[8192]{0}', space=vmem, size = 0x2000, scoped, tag = 'input window, operand 0, single buffered']
    #allocation3 [shape = 's32[1]{0}', space=sflag, size = 0x4, scoped, tag = 'scoped memory for tpu_custom_call.1']
    #allocation4 [shape = 's32[1]{0}', space=sflag, size = 0x4, scoped, tag = 'scoped memory for tpu_custom_call.1']
    #allocation5 [shape = 'u8[4096]{0}', space=vmem, size = 0x1000, scoped, tag = 'output window, operand 0, single buffered']
    %6 = vsyncpa [#allocation3], 0
    %7 = vsyncpa [#allocation4], 0
    // Predicated region
    $region2: #{tpu_custom_call.1} parent=1 // pred_check
      _
    $region3: #{tpu_custom_call.1} parent=1 // pred_check_branch
      %9 = sbr.rel (0) target = $region5
    $region4: #{tpu_custom_call.1} parent=1 // pred_region
      %s10 = sadd.s32 0, 0
      %s11 = smul.u32 2, %s10
      %s13 = ssub.s32 256, 256
      %14 = vsyncadd [#allocation3], %s13
      %s15 = smul.addr %s11, 128
      %s16 = scalar_lea.hbm %s0, %s15
      %s18 = sshll.u32 [#allocation2], 4
      %s19 = int_to_ptr.vmem [resolvable:$true] %s18
      %21 = dma.hbm_to_vmem [thread:$0]  %s16, 256, %s19, [#allocation3]
    $region5: #{tpu_custom_call.1} parent=1 // pred_fallthru
      _
    // Predicated region
    $region6: #{tpu_custom_call.1} parent=1 // pred_check
      _
    $region7: #{tpu_custom_call.1} parent=1 // pred_check_branch
      %23 = sbr.rel (0) target = $region9
    $region8: #{tpu_custom_call.1} parent=1 // pred_region
      %24 = dma.done [#allocation3], 256
    $region9: #{tpu_custom_call.1} parent=1 // pred_fallthru
      _
    %s25 = sadd.s32 0, 0
    %s26 = smul.u32 2, %s25
    %p27 = scmp.eq.s32.totalorder 0, 0
    // Predicated region
    $region10: #{tpu_custom_call.1} parent=1 // pred_check
      %p28 = pneg %p27
    $region11: #{tpu_custom_call.1} parent=1 // pred_check_branch
      %30 = sbr.rel (%p28) target = $region13
    $region12: #{tpu_custom_call.1} parent=1 // pred_region
      %vm31 = vcmask 64512
      %32 = vst.msk [vmem:[#allocation5] sm:$0xff] %vm31, 0.0
    $region13: #{tpu_custom_call.1} parent=1 // pred_fallthru
      _
    %v33 = vld [vmem:[#allocation2] sm:$0xff]
    %v34 = vld [vmem:[#allocation2 + $0x8] sm:$0xff]
    %v35 = vld [vmem:[#allocation5] sm:$0xff]
    %36 = vmatprep.subr.mxu0 %v34
    %37 = vmatpush1.xpose.msra.mxu0 %v33
    %38 = vmatprep.subr.mxu0 0.0
    %39 = vmatpush1.xpose.msra.mxu0 0.0
    %40 = vmatprep.subr.mxu0 0.0
    %41 = vmatpush1.xpose.msra.mxu0 0.0
    %42 = vmatprep.subr.mxu0 0.0
    %43 = vmatpush1.xpose.msra.mxu0 0.0
    %44 = vmatprep.subr.mxu0 0.0
    %45 = vmatpush1.xpose.msra.mxu0 0.0
    %46 = vmatprep.subr.mxu0 0.0
    %47 = vmatpush1.xpose.msra.mxu0 0.0
    %48 = vmatprep.subr.mxu0 0.0
    %49 = vmatpush1.xpose.msra.mxu0 0.0
    %50 = vmatprep.subr.mxu0 0.0
    %51 = vmatpush1.xpose.msra.mxu0 0.0
    %52 = vmatprep.subr.mxu0 0.0
    %53 = vmatpush1.xpose.msra.mxu0 0.0
    %54 = vmatprep.subr.mxu0 0.0
    %55 = vmatpush1.xpose.msra.mxu0 0.0
    %56 = vmatprep.subr.mxu0 0.0
    %57 = vmatpush1.xpose.msra.mxu0 0.0
    %58 = vmatprep.subr.mxu0 0.0
    %59 = vmatpush1.xpose.msra.mxu0 0.0
    %60 = vmatprep.subr.mxu0 0.0
    %61 = vmatpush1.xpose.msra.mxu0 0.0
    %62 = vmatprep.subr.mxu0 0.0
    %63 = vmatpush1.xpose.msra.mxu0 0.0
    %64 = vmatprep.subr.mxu0 0.0
    %65 = vmatpush1.xpose.msra.mxu0 0.0
    %66 = vmatprep.subr.mxu0 0.0
    %67 = vmatpush1.xpose.msra.mxu0 0.0
    %68 = vmatprep.subr.mxu0 0.0
    %69 = vmatpush1.xpose.msra.mxu0 0.0
    %70 = vmatprep.subr.mxu0 0.0
    %71 = vmatpush1.xpose.msra.mxu0 0.0
    %72 = vmatprep.subr.mxu0 0.0
    %73 = vmatpush1.xpose.msra.mxu0 0.0
    %74 = vmatprep.subr.mxu0 0.0
    %75 = vmatpush1.xpose.msra.mxu0 0.0
    %76 = vmatprep.subr.mxu0 0.0
    %77 = vmatpush1.xpose.msra.mxu0 0.0
    %78 = vmatprep.subr.mxu0 0.0
    %79 = vmatpush1.xpose.msra.mxu0 0.0
    %80 = vmatprep.subr.mxu0 0.0
    %81 = vmatpush1.xpose.msra.mxu0 0.0
    %82 = vmatprep.subr.mxu0 0.0
    %83 = vmatpush1.xpose.msra.mxu0 0.0
    %84 = vmatprep.subr.mxu0 0.0
    %85 = vmatpush1.xpose.msra.mxu0 0.0
    %86 = vmatprep.subr.mxu0 0.0
    %87 = vmatpush1.xpose.msra.mxu0 0.0
    %88 = vmatprep.subr.mxu0 0.0
    %89 = vmatpush1.xpose.msra.mxu0 0.0
    %90 = vmatprep.subr.mxu0 0.0
    %91 = vmatpush1.xpose.msra.mxu0 0.0
    %92 = vmatprep.subr.mxu0 0.0
    %93 = vmatpush1.xpose.msra.mxu0 0.0
    %94 = vmatprep.subr.mxu0 0.0
    %95 = vmatpush1.xpose.msra.mxu0 0.0
    %96 = vmatprep.subr.mxu0 0.0
    %97 = vmatpush1.xpose.msra.mxu0 0.0
    %98 = vmatprep.subr.mxu0 0.0
    %99 = vmatpush1.xpose.msra.mxu0 0.0
    %100 = vmatprep.mubr.f32.mxu0 %v34
    %101 = vmatmul.mubr.f32.gmra.mrb[0].mxu0 %v33
    %v102 = vpop.f32.mrb[0].mxu0
    %v103 = vadd.f32 0.0, %v102
    %v104 = vpop.f32.mrb[0].mxu0
    %105 = vdwg.mxu0
    %v106 = vadd.f32 %v35, %v103
    %vm107 = vcmask 64512
    %108 = vst.msk [vmem:[#allocation5] sm:$0xff] %vm107, %v106
    // Predicated region
    $region14: #{tpu_custom_call.1} parent=1 // pred_check
      _
    $region15: #{tpu_custom_call.1} parent=1 // pred_check_branch
      %110 = sbr.rel (0) target = $region17
    $region16: #{tpu_custom_call.1} parent=1 // pred_region
      %s112 = ssub.s32 128, 128
      %113 = vsyncadd [#allocation4], %s112
      %s115 = sshll.u32 [#allocation5], 4
      %s116 = int_to_ptr.vmem [resolvable:$true] %s115
      %118 = dma.vmem_to_hbm [thread:$0]  %s116, 128, %s1, [#allocation4]
    $region17: #{tpu_custom_call.1} parent=1 // pred_fallthru
      _
    // Predicated region
    $region18: #{tpu_custom_call.1} parent=1 // pred_check
      _
    $region19: #{tpu_custom_call.1} parent=1 // pred_check_branch
      %120 = sbr.rel (0) target = $region21
    $region20: #{tpu_custom_call.1} parent=1 // pred_region
      %121 = dma.done [#allocation4], 128
    $region21: #{tpu_custom_call.1} parent=1 // pred_fallthru
      _
    %122 = vsyncpa [#allocation3], 1
    %123 = vsyncpa [#allocation4], 1

</llo_original>
